<compile_context>
chip_gen: v7x
topology: tpu7x:2x2x1
jax: 0.10.0
libtpu: 0.0.40
codegen_flags: <defaults>
</compile_context>

<pallas_src>
import functools
import math

import jax
import jax.numpy as jnp
import numpy as np
from jax.experimental import pallas as pl
from jax.experimental.pallas import tpu as pltpu


# ----------------------------------------------------------------------------
# Buffer setup (equivalent of PositionalEncoding.__init__ registering `pe`)
# ----------------------------------------------------------------------------
def make_positional_encoding_table(max_len: int, d_model: int) -> jnp.ndarray:
    position = jnp.arange(0, max_len, dtype=jnp.float32)[:, None]             # (L, 1)
    div_term = jnp.exp(
        jnp.arange(0, d_model, 2, dtype=jnp.float32) * (-(math.log(10000.0) / d_model))
    )                                                                          # (ceil(D/2),)
    pe = jnp.zeros((max_len, d_model), dtype=jnp.float32)
    pe = pe.at[:, 0::2].set(jnp.sin(position * div_term))
    if d_model % 2 == 1:
        pe = pe.at[:, 1::2].set(jnp.cos(position * div_term[:-1]))
    else:
        pe = pe.at[:, 1::2].set(jnp.cos(position * div_term))
    return pe                                                                  # (L, D)


# ----------------------------------------------------------------------------
# Pallas kernels
# ----------------------------------------------------------------------------
def _pe_add_kernel(x_ref, pe_ref, o_ref):
    # x_ref: (TILE_B, TILE_N), pe_ref: (1, TILE_N) -> broadcast over sublanes.
    y = x_ref[...].astype(jnp.float32) + pe_ref[...].astype(jnp.float32)
    o_ref[...] = y.astype(o_ref.dtype)


def _pe_add_dropout_kernel(x_ref, pe_ref, bits_ref, o_ref, *, threshold, scale):
    # Train-mode forward: (x + pe) -> dropout(p) with 1/(1-p) scaling.
    # Integer-threshold keep test on raw uint32 bits: P(keep) = 1 - p.
    y = x_ref[...].astype(jnp.float32) + pe_ref[...].astype(jnp.float32)
    keep = bits_ref[...] >= jnp.uint32(threshold)
    o_ref[...] = jnp.where(keep, y * jnp.float32(scale), jnp.float32(0.0)).astype(
        o_ref.dtype
    )


# ----------------------------------------------------------------------------
# Tile selection helpers
# ----------------------------------------------------------------------------
def _largest_divisor_leq(n: int, cap: int, multiple_of: int = 1):
    best = None
    d = 1
    while d * d <= n:
        if n % d == 0:
            for c in (d, n // d):
                if c <= cap and c % multiple_of == 0:
                    if best is None or c > best:
                        best = c
        d += 1
    return best


def _pick_tiles(B: int, N: int, itemsize: int):
    # Batch (sublane) tile: full B when small or not 8-divisible (keeps the
    # block's second-to-last dim either a multiple of 8 or the full dim).
    tile_b = B if (B <= 8 or B % 8 != 0) else 8
    # Lane tile: divisor of N, 128-multiple preferred, block ~<= 1 MiB.
    target = max(128, (1 << 20) // (itemsize * tile_b))
    tile_n = _largest_divisor_leq(N, target, multiple_of=128)
    if tile_n is None:
        tile_n = _largest_divisor_leq(N, target, multiple_of=1)
    if tile_n is None:
        tile_n = N
    return tile_b, tile_n


# ----------------------------------------------------------------------------
# Wrapper (the module's forward)
# ----------------------------------------------------------------------------
def positional_encoding_forward(x, pe_table, *, dropout_p=0.1, train=False, rng_key=None):
    """
    Args:
      x:        (B, S, D) embeddings
      pe_table: (max_len, D) sinusoidal table, max_len >= S
    Returns:
      (B, S, D) array, same dtype as x
    """
    B, S, D = x.shape
    N = S * D

    # Lane-dense 2-D view: x -> (B, S*D), pe -> (1, S*D) broadcast over batch.
    x2 = x.reshape(B, N)
    pe2 = pe_table[:S].astype(x.dtype).reshape(1, N)   # narrow DMA stream to x dtype

    tile_b, tile_n = _pick_tiles(B, N, jnp.dtype(x.dtype).itemsize)
    grid = (B // tile_b, N // tile_n)

    x_spec = pl.BlockSpec((tile_b, tile_n), lambda b, j: (b, j))
    pe_spec = pl.BlockSpec((1, tile_n), lambda b, j: (0, j))
    bits_spec = pl.BlockSpec((tile_b, tile_n), lambda b, j: (b, j))
    out_spec = pl.BlockSpec((tile_b, tile_n), lambda b, j: (b, j))
    out_shape = jax.ShapeDtypeStruct((B, N), x.dtype)
    cparams = pltpu.CompilerParams(dimension_semantics=("parallel", "parallel"))

    if (not train) or dropout_p == 0.0:
        out2 = pl.pallas_call(
            _pe_add_kernel,
            out_shape=out_shape,
            grid=grid,
            in_specs=[x_spec, pe_spec],
            out_specs=out_spec,
            compiler_params=cparams,
        )(x2, pe2)
        return out2.reshape(B, S, D)

    if dropout_p >= 1.0:
        return jnp.zeros_like(x)
    if rng_key is None:
        rng_key = jax.random.PRNGKey(0)

    bits = jax.random.bits(rng_key, (B, N), dtype=jnp.uint32)
    threshold = min(int(round(float(dropout_p) * float(2 ** 32))), 2 ** 32 - 1)
    scale = 1.0 / (1.0 - float(dropout_p))
    kernel = functools.partial(_pe_add_dropout_kernel, threshold=threshold, scale=scale)

    out2 = pl.pallas_call(
        kernel,
        out_shape=out_shape,
        grid=grid,
        in_specs=[x_spec, pe_spec, bits_spec],
        out_specs=out_spec,
        compiler_params=cparams,
    )(x2, pe2, bits)
    return out2.reshape(B, S, D)


# ----------------------------------------------------------------------------
# Main
# ----------------------------------------------------------------------------
if __name__ == "__main__":
    B, S, D = 2, 8, 32
    MAX_LEN = 64  # small stand-in for the module's max_len=10000 buffer
    P = 0.1

    key = jax.random.PRNGKey(0)
    key_x, key_drop = jax.random.split(key)
    x = jax.random.normal(key_x, (B, S, D), dtype=jnp.float32)

    pe_table = make_positional_encoding_table(MAX_LEN, D)

    # --- eval-mode forward (dropout = identity), verified against reference ---
    out_eval = positional_encoding_forward(x, pe_table, dropout_p=P, train=False)
    out_eval = jax.block_until_ready(out_eval)

    ref = np.asarray(x) + np.asarray(pe_table[:S])[None, :, :]
    np.testing.assert_allclose(np.asarray(out_eval), ref, rtol=1e-6, atol=1e-6)

    # --- train-mode forward (dropout applied in-kernel, integer threshold) ---
    out_train = positional_encoding_forward(
        x, pe_table, dropout_p=P, train=True, rng_key=key_drop
    )
    out_train = jax.block_until_ready(out_train)
    assert out_train.shape == (B, S, D)

    # kept entries must equal (x + pe) / (1 - p); dropped entries are exactly 0
    out_train_np = np.asarray(out_train)
    kept = out_train_np != 0.0
    np.testing.assert_allclose(
        out_train_np[kept], (ref / (1.0 - P))[kept], rtol=1e-5, atol=1e-5
    )

    print("KERNEL_OK")
</pallas_src>

<mosaic_0001>
module attributes {stable_mosaic.version = 11 : i64} {
  func.func @_pe_add_kernel(%arg0: i32, %arg1: i32, %arg2: memref<2x256xf32, #tpu.memory_space<vmem>>, %arg3: memref<1x256xf32, #tpu.memory_space<vmem>>, %arg4: memref<2x256xf32, #tpu.memory_space<vmem>>) attributes {dimension_semantics = [#tpu.dimension_semantics<parallel>, #tpu.dimension_semantics<parallel>], iteration_bounds = array<i64: 1, 1>, scalar_prefetch = 0 : i64, scratch_operands = 0 : i64, tpu.core_type = #tpu.core_type<tc>, window_params = [{transform_indices = @transform_0, window_bounds = array<i64: 2, 256>}, {transform_indices = @transform_1, window_bounds = array<i64: 1, 256>}, {transform_indices = @transform_2, window_bounds = array<i64: 2, 256>}]} {
    %c0 = arith.constant 0 : index
    %c0_0 = arith.constant 0 : index
    %0 = vector.load %arg2[%c0, %c0_0] : memref<2x256xf32, #tpu.memory_space<vmem>>, vector<2x256xf32>
    %c0_1 = arith.constant 0 : index
    %c0_2 = arith.constant 0 : index
    %1 = vector.load %arg3[%c0_1, %c0_2] : memref<1x256xf32, #tpu.memory_space<vmem>>, vector<1x256xf32>
    %2 = vector.broadcast %1 : vector<1x256xf32> to vector<2x256xf32>
    %3 = arith.addf %0, %2 : vector<2x256xf32>
    %c0_3 = arith.constant 0 : index
    %c0_4 = arith.constant 0 : index
    %4 = vector.load %arg4[%c0_3, %c0_4] : memref<2x256xf32, #tpu.memory_space<vmem>>, vector<2x256xf32>
    tpu.vector_store %arg4[%c0_3, %c0_4], %3 {strides = array<i32>} : memref<2x256xf32, #tpu.memory_space<vmem>>, vector<2x256xf32>,
    return
  }
  func.func @transform_0(%arg0: i32, %arg1: i32) -> (i32, i32) {
    %c0_i32 = arith.constant 0 : i32
    return %arg0, %arg1 : i32, i32
  }
  func.func @transform_1(%arg0: i32, %arg1: i32) -> (i32, i32) {
    %c0_i32 = arith.constant 0 : i32
    %c0_i32_0 = arith.constant 0 : i32
    return %c0_i32, %arg1 : i32, i32
  }
  func.func @transform_2(%arg0: i32, %arg1: i32) -> (i32, i32) {
    %c0_i32 = arith.constant 0 : i32
    return %arg0, %arg1 : i32, i32
  }
}

</mosaic_0001>

<llo_original>
// kernel: tpu_custom_call.1
$region0: #{tpu_custom_call.1}
  #allocation0 [shape = 'u32[]', space=smem, size = 0x4, offset = 0x4, fixed_abs, tag = 'smem constant byte address 0x4 - core index']
  #allocation1 [shape = 'u32[144,128]{1,0:T(1,128)}', space=vmem, size = 0x12000, scoped, tag = 'internal scratch']
  %s0 = inlined_call_operand.hbm [shape: f32[2,256], index: 0, kind: input, shape index: {}]
  %s1 = inlined_call_operand.vmem [shape: f32[1,256], index: 1, kind: input, shape index: {}]
  %s2 = inlined_call_operand.hbm [shape: f32[2,256], index: 2, kind: output, shape index: {}]
  %s3 = sld [smem:[#allocation0]]
  $region22: #{tpu_custom_call.1} parent=0
    _
  %s5 = ssub.s32 1, %s3
  %s6 = scalar_select 0, %s5, %s3
  $region1: #{tpu_custom_call.1} parent=0
    #allocation2 [shape = 'u8[2048]{0}', space=vmem, size = 0x800, scoped, tag = 'input window, operand 0, single buffered']
    #allocation3 [shape = 's32[1]{0}', space=sflag, size = 0x4, scoped, tag = 'scoped memory for tpu_custom_call.1']
    #allocation4 [shape = 's32[1]{0}', space=sflag, size = 0x4, scoped, tag = 'scoped memory for tpu_custom_call.1']
    #allocation5 [shape = 'u8[2048]{0}', space=vmem, size = 0x800, scoped, tag = 'output window, operand 0, single buffered']
    %7 = vsyncpa [#allocation3], 0
    %8 = vsyncpa [#allocation4], 0
    // Predicated region
    $region2: #{tpu_custom_call.1} parent=1 // pred_check
      _
    $region3: #{tpu_custom_call.1} parent=1 // pred_check_branch
      %10 = sbr.rel (0) target = $region5
    $region4: #{tpu_custom_call.1} parent=1 // pred_region
      %s12 = ssub.s32 64, 64
      %13 = vsyncadd [#allocation3], %s12
      %s15 = sshll.u32 [#allocation2], 4
      %s16 = int_to_ptr.vmem [resolvable:$true] %s15
      %18 = dma.hbm_to_vmem [thread:$0]  %s0, 64, %s16, [#allocation3]
    $region5: #{tpu_custom_call.1} parent=1 // pred_fallthru
      _
    // Predicated region
    $region6: #{tpu_custom_call.1} parent=1 // pred_check
      _
    $region7: #{tpu_custom_call.1} parent=1 // pred_check_branch
      %20 = sbr.rel (0) target = $region9
    $region8: #{tpu_custom_call.1} parent=1 // pred_region
      _
    $region9: #{tpu_custom_call.1} parent=1 // pred_fallthru
      _
    // Predicated region
    $region10: #{tpu_custom_call.1} parent=1 // pred_check
      _
    $region11: #{tpu_custom_call.1} parent=1 // pred_check_branch
      %22 = sbr.rel (0) target = $region13
    $region12: #{tpu_custom_call.1} parent=1 // pred_region
      %23 = dma.done [#allocation3], 64
    $region13: #{tpu_custom_call.1} parent=1 // pred_fallthru
      _
    %v24 = vld [vmem:[#allocation2] sm:$0xf]
    %v25 = vld [vmem:[%s1] sm:$0x3]
    %v27 = vlaneseq
    %v28 = vshrl.u32 %v27, 7
    %v29 = vsub.s32 0, %v28
    %v30 = vrot.slane %v25, %v29
    %v31 = vlaneseq
    %v32 = vshrl.u32 %v31, 7
    %v33 = vsub.s32 1, %v32
    %v34 = vrot.slane %v25, %v33
    %v35 = vcombine.low %v30, %v34
    %v37 = vunpack.c.l.s4 1983009808
    %v38 = vunpack.c.0.s8 %v37
    %v39 = vlaneseq
    %v40 = vshrl.u32 %v39, 7
    %v41 = vsub.s32 %v38, %v40
    %v42 = vrot.slane %v35, %v41
    %v44 = vadd.f32 %v24, %v42
    %45 = vst [vmem:[#allocation5] sm:$0xf] %v44
    // Predicated region
    $region14: #{tpu_custom_call.1} parent=1 // pred_check
      _
    $region15: #{tpu_custom_call.1} parent=1 // pred_check_branch
      %47 = sbr.rel (0) target = $region17
    $region16: #{tpu_custom_call.1} parent=1 // pred_region
      %s49 = ssub.s32 64, 64
      %50 = vsyncadd [#allocation4], %s49
      %s52 = sshll.u32 [#allocation5], 4
      %s53 = int_to_ptr.vmem [resolvable:$true] %s52
      %55 = dma.vmem_to_hbm [thread:$0]  %s53, 64, %s2, [#allocation4]
    $region17: #{tpu_custom_call.1} parent=1 // pred_fallthru
      _
    // Predicated region
    $region18: #{tpu_custom_call.1} parent=1 // pred_check
      _
    $region19: #{tpu_custom_call.1} parent=1 // pred_check_branch
      %57 = sbr.rel (0) target = $region21
    $region20: #{tpu_custom_call.1} parent=1 // pred_region
      %58 = dma.done [#allocation4], 64
    $region21: #{tpu_custom_call.1} parent=1 // pred_fallthru
      _
    %59 = vsyncpa [#allocation3], 1
    %60 = vsyncpa [#allocation4], 1

</llo_original>
